<compile_context>
chip_gen: v6e
topology: v6e:2x2x1
jax: 0.10.0
libtpu: 0.0.40
codegen_flags: <defaults>
</compile_context>

<pallas_src>
from typing import Any, Dict, List, NamedTuple, Optional, Tuple

import numpy as np
import jax
import jax.numpy as jnp
from jax.experimental import pallas as pl
from jax.experimental.pallas import tpu as pltpu

KEY2CATDIM = {"vector": 1, "crossattn": 2, "concat": 1}

# Default (maximum) tile sizes: big enough to amortize per-grid-step overhead,
# small enough (double-buffered) to fit comfortably in v7x's 64 MiB VMEM.
TM_MAX = 512
TN_MAX = 512
TK_MAX = 2048


def _round_up(x: int, m: int) -> int:
    return ((x + m - 1) // m) * m


def _largest_aligned_divisor(padded: int, max_tile: int, align: int) -> int:
    """Largest multiple of `align` that divides `padded` and is <= max_tile."""
    best = align
    t = align
    while t <= max_tile:
        if padded % t == 0:
            best = t
        t += align
    return best


def _next_smaller_divisor(padded: int, cur: int, align: int) -> int:
    t = cur - align
    while t >= align:
        if padded % t == 0:
            return t
        t -= align
    return align


_VMEM_BUDGET_CACHE: Optional[int] = None


def _vmem_budget_bytes() -> int:
    """Per-call VMEM budget (~75% of physical capacity; v7x-safe fallback)."""
    global _VMEM_BUDGET_CACHE
    if _VMEM_BUDGET_CACHE is None:
        cap = 64 << 20  # conservative v7x fallback
        try:
            info = pltpu.get_tpu_info()
            cap = int(getattr(info, "vmem_capacity_bytes", cap))
        except Exception:
            pass
        _VMEM_BUDGET_CACHE = (cap * 3) // 4
    return _VMEM_BUDGET_CACHE


# ----------------------------------------------------------------------------
# Pre-padded fused-linear parameters (built ONCE, reused every forward).
# ----------------------------------------------------------------------------
class FusedLinearParams(NamedTuple):
    w_p: jax.Array   # (Kp, Np) bf16, tile-aligned, padded once
    b_p: jax.Array   # (1, Np) f32, padded once
    K: int
    N: int
    Kp: int
    Np: int
    TK: int          # K tile (multiple of 128 dividing Kp, or == K)
    tm_max: int
    tn_max: int


def prepare_fused_linear(w: jax.Array, b: jax.Array, *, tm: int = TM_MAX,
                         tn: int = TN_MAX, tk: int = TK_MAX) -> FusedLinearParams:
    """Pad W/bias to tile-aligned shapes once (hoisted out of the forward)."""
    K, N = w.shape
    assert b.shape == (1, N)
    if K <= tk:
        TK, Kp = K, K                         # full-dim K block: no K padding
    else:
        Kp = _round_up(K, 128)
        TK = _largest_aligned_divisor(Kp, tk, 128)
    Np = _round_up(N, 128)                    # lane-dense output stores
    w_p = jnp.pad(w.astype(jnp.bfloat16), ((0, Kp - K), (0, Np - N)))
    b_p = jnp.pad(b.astype(jnp.float32), ((0, 0), (0, Np - N)))
    return FusedLinearParams(w_p, b_p, K, N, Kp, Np, TK, tm, tn)


# ----------------------------------------------------------------------------
# Pallas kernel: tiled fused linear  out = (x @ W + b) * keep
#   3-D grid (M, N, K); f32 accumulation either directly into the resident
#   output block (f32 out) or into a VMEM scratch (bf16 out); per-tile bf16
#   cast of x; optional per-output-column keep mask in the f32 epilogue.
# ----------------------------------------------------------------------------
def _make_fused_linear_kernel(has_keep: bool, use_scratch: bool):
    def kernel(*refs):
        if use_scratch:
            *io_refs, acc_ref = refs
        else:
            io_refs = refs
        if has_keep:
            x_ref, w_ref, b_ref, keep_ref, o_ref = io_refs
        else:
            x_ref, w_ref, b_ref, o_ref = io_refs
        if not use_scratch:
            acc_ref = o_ref        # f32 output block is resident across k

        k = pl.program_id(2)

        @pl.when(k == 0)
        def _():
            acc_ref[...] = jnp.zeros_like(acc_ref)

        acc_ref[...] += jnp.dot(x_ref[...].astype(jnp.bfloat16), w_ref[...],
                                preferred_element_type=jnp.float32)

        @pl.when(k == pl.num_programs(2) - 1)
        def _():
            acc = acc_ref[...] + b_ref[...]          # f32 bias epilogue
            if has_keep:
                acc = acc * keep_ref[...]            # exact 0/1 column mask
            o_ref[...] = acc.astype(o_ref.dtype)

    return kernel


def pallas_fused_linear(x2d: jax.Array, params: FusedLinearParams,
                        keep: Optional[jax.Array] = None,
                        out_dtype=jnp.float32) -> jax.Array:
    """Returns (x2d @ W + b) * keep with shape (M, N) in out_dtype.

    x2d: (M, K) f32/bf16 (cast to bf16 per-tile inside the kernel).
    keep: optional (1, N) f32 of 0/1 per-output-column ucg mask; None = keep all
          (dispatches the specialized kernel without the keep stream).
    W / bias come pre-padded from prepare_fused_linear (no per-call W copy).
    """
    M, K = x2d.shape
    assert K == params.K
    Kp, Np, TK = params.Kp, params.Np, params.TK

    # --- M tile: full-dim block (zero padding) when it fits -----------------
    if M <= params.tm_max:
        TM, Mp = M, M
    else:
        Mp = _round_up(M, 16)
        TM = _largest_aligned_divisor(Mp, params.tm_max, 16)

    # --- N tile ---------------------------------------------------------------
    TN = _largest_aligned_divisor(Np, params.tn_max, 128)
    # v7x megacore: keep >= 2 blocks along the parallel axes when possible.
    if (Mp // TM) * (Np // TN) < 2 and Np >= 256:
        TN = _largest_aligned_divisor(Np, Np // 2, 128)

    has_keep = keep is not None
    use_scratch = np.dtype(out_dtype) != np.dtype(np.float32)
    x_bytes = np.dtype(x2d.dtype).itemsize
    out_bytes = np.dtype(out_dtype).itemsize

    # --- keep the double-buffered working set inside the VMEM budget --------
    budget = _vmem_budget_bytes()

    def _est(tm_, tn_, tk_):
        b = 2 * tm_ * tk_ * x_bytes            # x (double-buffered)
        b += 2 * tk_ * tn_ * 2                 # W bf16 (double-buffered)
        b += (2 + (2 if has_keep else 0)) * tn_ * 4
        b += 2 * tm_ * tn_ * out_bytes         # output
        if use_scratch:
            b += tm_ * tn_ * 4                 # f32 accumulator
        return b

    while _est(TM, TN, TK) > budget:
        if TK > 128 and Kp % 128 == 0:
            TK = _next_smaller_divisor(Kp, TK, 128)
        elif TN > 128:
            TN = _next_smaller_divisor(Np, TN, 128)
        elif TM > 16 and Mp % 16 == 0:
            TM = _next_smaller_divisor(Mp, TM, 16)
        else:
            break

    # --- pad x only when the tiling actually requires it --------------------
    x_p = x2d
    if (Mp, Kp) != (M, K):
        x_p = jnp.pad(x2d, ((0, Mp - M), (0, Kp - K)))

    grid = (Mp // TM, Np // TN, Kp // TK)

    in_arrays = [x_p, params.w_p, params.b_p]
    in_specs = [
        pl.BlockSpec((TM, TK), lambda i, j, k: (i, k)),
        pl.BlockSpec((TK, TN), lambda i, j, k: (k, j)),
        pl.BlockSpec((1, TN), lambda i, j, k: (0, j)),
    ]
    if has_keep:
        keep_p = jnp.pad(jnp.asarray(keep, jnp.float32),
                         ((0, 0), (0, Np - params.N)))
        in_arrays.append(keep_p)
        in_specs.append(pl.BlockSpec((1, TN), lambda i, j, k: (0, j)))

    scratch_shapes = [pltpu.VMEM((TM, TN), jnp.float32)] if use_scratch else []

    cost = pl.CostEstimate(
        flops=2 * Mp * Kp * Np,
        transcendentals=0,
        bytes_accessed=(Mp * Kp * x_bytes + Kp * Np * 2 + Mp * Np * out_bytes
                        + (2 + int(has_keep)) * Np * 4),
    )
    vmem_limit = int(min(max(2 * _est(TM, TN, TK), 32 << 20), budget))

    out_p = pl.pallas_call(
        _make_fused_linear_kernel(has_keep, use_scratch),
        out_shape=jax.ShapeDtypeStruct((Mp, Np), out_dtype),
        grid_spec=pltpu.PrefetchScalarGridSpec(
            num_scalar_prefetch=0,
            grid=grid,
            in_specs=in_specs,
            out_specs=pl.BlockSpec((TM, TN), lambda i, j, k: (i, j)),
            scratch_shapes=scratch_shapes,
        ),
        compiler_params=pltpu.CompilerParams(
            dimension_semantics=("parallel", "parallel", "arbitrary"),
            vmem_limit_bytes=vmem_limit),
        cost_estimate=cost,
    )(*in_arrays)

    if (Mp, Np) != (M, params.N):
        out_p = out_p[:M, :params.N]
    return out_p


# ----------------------------------------------------------------------------
# Synthetic conditioners (deterministically initialized linear embedders)
# ----------------------------------------------------------------------------
class PallasLinearConditioner:
    """BaseConditioner stand-in: Linear projection of batch[input_key],
    emitting {output_key: embedding}. force_zero_embedding zeros the output."""

    def __init__(self, input_key: str, output_key: str, in_dim: int,
                 out_dim: int, ucg_rate: float = 0.0, seed: int = 0):
        self.input_key = input_key
        self.output_key = output_key
        self.ucg_rate = float(ucg_rate)
        self.out_dim = out_dim
        k_w, k_b = jax.random.split(jax.random.PRNGKey(seed))
        w_f32 = (jax.random.normal(k_w, (in_dim, out_dim), jnp.float32)
                 / jnp.sqrt(jnp.float32(in_dim)))
        self.weight = w_f32                              # f32 master copy
        self.weight_bf16 = w_f32.astype(jnp.bfloat16)    # reference operand
        self.bias = 0.01 * jax.random.normal(k_b, (1, out_dim), jnp.float32)
        # Padding / bf16 prep hoisted out of the per-call path:
        self._params = prepare_fused_linear(self.weight, self.bias)

    def forward(self, batch: Dict[str, Any],
                force_zero_embedding: bool = False, **kwargs) -> Dict[str, jax.Array]:
        x = jnp.asarray(batch[self.input_key], jnp.float32)
        lead = x.shape[:-1]
        if force_zero_embedding:
            # Skip the matmul entirely: exact zeros, no x/W HBM reads.
            return {self.output_key: jnp.zeros((*lead, self.out_dim), jnp.float32)}
        x2d = x.reshape(-1, x.shape[-1])
        out2d = pallas_fused_linear(x2d, self._params)   # all-keep fast path
        return {self.output_key: out2d.reshape(*lead, self.out_dim)}

    # Pure-JAX reference (bf16 MXU operands, f32 accumulation -- same numerics
    # contract as the kernel).
    def reference(self, batch, force_zero_embedding=False):
        x = jnp.asarray(batch[self.input_key], jnp.float32)
        if force_zero_embedding:
            out = jnp.zeros((*x.shape[:-1], self.out_dim), jnp.float32)
        else:
            out = jnp.dot(x.astype(jnp.bfloat16), self.weight_bf16,
                          preferred_element_type=jnp.float32) + self.bias
        return {self.output_key: out}


# ----------------------------------------------------------------------------
# ConditionerWrapper (forward semantics of the PyTorch module)
# ----------------------------------------------------------------------------
class ConditionerWrapper:
    def __init__(self, conditioners: Optional[List[PallasLinearConditioner]] = None,
                 rng_seed: int = 1234, out_dtype=jnp.float32):
        self.conditioners = list(conditioners) if conditioners is not None else []
        self.out_dtype = out_dtype                   # bf16 halves writeback if OK
        self._rng_key = jax.random.PRNGKey(rng_seed)  # batched ucg coin-flips

        # Group *consecutive* conditioners sharing (input_key, output_key):
        # their outputs are concatenated along the feature axis anyway, so one
        # wide matmul with W = [W_1 | W_2 | ...] produces the already-
        # concatenated embedding (one kernel launch, lane-dense output).
        # TODO(synk): could further fuse groups sharing input_key but different
        # output_keys into one matmul and split columns afterwards.
        self._groups: List[Tuple[Tuple[str, str], List[int]]] = []
        for idx, c in enumerate(self.conditioners):
            key = (c.input_key, c.output_key)
            if self._groups and self._groups[-1][0] == key:
                self._groups[-1][1].append(idx)
            else:
                self._groups.append((key, [idx]))

        # Pre-fuse + pre-pad per-group parameters ONCE (static across forwards).
        self._group_params: List[Tuple[FusedLinearParams, List[int]]] = []
        for _, idxs in self._groups:
            conds = [self.conditioners[i] for i in idxs]
            w_cat = jnp.concatenate([c.weight for c in conds], axis=1)
            b_cat = jnp.concatenate([c.bias for c in conds], axis=1)
            dims = [c.out_dim for c in conds]
            self._group_params.append((prepare_fused_linear(w_cat, b_cat), dims))

    def conditioner_sanity_check(self, ucg_keys):
        cond_input_keys = [c.input_key for c in self.conditioners]
        assert all(key in set(cond_input_keys) for key in ucg_keys)

    def _resolve_force_zero(self, ucg_keys, set_ucg_rate_zero) -> List[bool]:
        """Per-conditioner force-zero flags; stochastic ucg draws are batched
        into ONE RNG draw + ONE host sync per forward."""
        flags: List[Optional[bool]] = []
        stochastic_idx: List[int] = []
        for i, c in enumerate(self.conditioners):
            if c.input_key in ucg_keys:
                flags.append(True)
            elif c.ucg_rate > 0 and (not set_ucg_rate_zero):
                flags.append(None)
                stochastic_idx.append(i)
            else:
                flags.append(False)
        if stochastic_idx:
            self._rng_key, sub = jax.random.split(self._rng_key)
            draws = np.asarray(
                jax.random.uniform(sub, (len(stochastic_idx),)))  # single sync
            for j, i in enumerate(stochastic_idx):
                flags[i] = bool(draws[j] < self.conditioners[i].ucg_rate)
        return [bool(f) for f in flags]

    def forward(self, batch: Dict[str, Any], ucg_keys: Optional[List[str]] = None,
                set_ucg_rate_zero: bool = False, *args, **kwargs):
        if ucg_keys is None:
            ucg_keys = []
        flags = self._resolve_force_zero(ucg_keys, set_ucg_rate_zero)

        wrapper_outputs: Dict[str, Any] = dict(cond={})
        for ((in_key, out_key), idxs), (gparams, dims) in zip(
                self._groups, self._group_params):
            grp_flags = [flags[i] for i in idxs]
            x = jnp.asarray(batch[in_key], jnp.float32)
            lead = x.shape[:-1]
            n_total = int(sum(dims))

            if all(grp_flags):
                # Entire group force-zeroed at trace time: skip the kernel.
                emb = jnp.zeros((*lead, n_total), self.out_dtype)
            else:
                x2d = x.reshape(-1, x.shape[-1])
                if not any(grp_flags):
                    # Steady-state path: no keep stream, no epilogue mask.
                    out2d = pallas_fused_linear(x2d, gparams,
                                                out_dtype=self.out_dtype)
                else:
                    keep_np = np.concatenate(
                        [np.full((1, d), 0.0 if f else 1.0, np.float32)
                         for d, f in zip(dims, grp_flags)], axis=1)
                    out2d = pallas_fused_linear(x2d, gparams,
                                                keep=jnp.asarray(keep_np),
                                                out_dtype=self.out_dtype)
                emb = out2d.reshape(*lead, n_total)

            if out_key in wrapper_outputs["cond"]:
                wrapper_outputs["cond"][out_key] = jnp.concatenate(
                    [wrapper_outputs["cond"][out_key], emb],
                    axis=KEY2CATDIM[out_key])
            else:
                wrapper_outputs["cond"][out_key] = emb
        return wrapper_outputs

    # Reference forward (same control flow, pure jnp math, per-conditioner).
    def forward_reference(self, batch, ucg_keys=None, set_ucg_rate_zero=False):
        if ucg_keys is None:
            ucg_keys = []
        out: Dict[str, Any] = dict(cond={})
        for conditioner in self.conditioners:
            force_zero = conditioner.input_key in ucg_keys
            co = conditioner.reference(batch, force_zero_embedding=force_zero)
            for key in co:
                if key in out["cond"]:
                    out["cond"][key] = jnp.concatenate(
                        [out["cond"][key], co[key]], axis=KEY2CATDIM[key])
                else:
                    out["cond"][key] = co[key]
        return out


# TODO(synk): nn.Module .to()/device/dtype bookkeeping has no kernel equivalent;
# parameters are kept as bf16 MXU operands + f32 bias here by construction.

if __name__ == "__main__":
    # Small, deterministic example shapes.
    B, S, D_IN = 2, 8, 32
    key = jax.random.PRNGKey(0)
    k_tok, k_vec = jax.random.split(key)
    batch = {
        "tokens":  jax.random.normal(k_tok, (B, S, D_IN), jnp.float32),
        "scalars": jax.random.normal(k_vec, (B, D_IN), jnp.float32),
    }

    conditioners = [
        # two crossattn conditioners -> fused into one (K, 96) matmul
        PallasLinearConditioner("tokens", "crossattn", D_IN, 32, seed=1),
        PallasLinearConditioner("tokens", "crossattn", D_IN, 64, seed=2),
        # two vector conditioners -> fused group; forced to zero via ucg_keys
        PallasLinearConditioner("scalars", "vector", D_IN, 32, seed=3),
        PallasLinearConditioner("scalars", "vector", D_IN, 32, seed=4),
    ]
    wrapper = ConditionerWrapper(conditioners)

    ucg_keys = ["scalars"]
    wrapper.conditioner_sanity_check(ucg_keys)

    out = wrapper.forward(batch, ucg_keys=ucg_keys, set_ucg_rate_zero=True)
    out = jax.tree_util.tree_map(jax.block_until_ready, out)

    ref = wrapper.forward_reference(batch, ucg_keys=ucg_keys,
                                    set_ucg_rate_zero=True)

    assert out["cond"]["crossattn"].shape == (B, S, 32 + 64)
    assert out["cond"]["vector"].shape == (B, 32 + 32)
    assert jnp.allclose(out["cond"]["crossattn"], ref["cond"]["crossattn"],
                        atol=1e-3, rtol=1e-3)
    assert jnp.allclose(out["cond"]["vector"], ref["cond"]["vector"],
                        atol=1e-3, rtol=1e-3)
    # vector conditioners were in ucg_keys -> forced zero embedding
    assert jnp.all(out["cond"]["vector"] == 0.0)

    # Unit check 1: per-column keep mask inside the fused kernel
    # (exercises the mixed keep/zero path deterministically).
    xk = jax.random.normal(jax.random.PRNGKey(7), (16, 32), jnp.float32)
    wk = jax.random.normal(jax.random.PRNGKey(8), (32, 64), jnp.float32)
    bk = 0.1 * jnp.ones((1, 64), jnp.float32)
    pk = prepare_fused_linear(wk, bk)
    keepk = jnp.concatenate(
        [jnp.ones((1, 32), jnp.float32), jnp.zeros((1, 32), jnp.float32)], axis=1)
    got = jax.block_until_ready(pallas_fused_linear(xk, pk, keep=keepk))
    want_full = jnp.dot(xk.astype(jnp.bfloat16), wk.astype(jnp.bfloat16),
                        preferred_element_type=jnp.float32) + bk
    want = jnp.where(keepk > 0.5, want_full, 0.0)
    assert got.shape == (16, 64)
    assert jnp.allclose(got, want, atol=1e-3, rtol=1e-3)
    assert jnp.all(got[:, 32:] == 0.0)

    # Unit check 2: multi-block grid -- K split into 3 steps (K padding path,
    # accumulation into the resident f32 output block), N split into >=2
    # parallel blocks (megacore rule), all-keep fast path.
    M2, K2, N2 = 48, 320, 384
    x2 = jax.random.normal(jax.random.PRNGKey(9), (M2, K2), jnp.float32)
    w2 = (jax.random.normal(jax.random.PRNGKey(10), (K2, N2), jnp.float32)
          / jnp.sqrt(jnp.float32(K2)))
    b2 = 0.01 * jax.random.normal(jax.random.PRNGKey(11), (1, N2), jnp.float32)
    p2 = prepare_fused_linear(w2, b2, tk=128, tn=256)
    got2 = jax.block_until_ready(pallas_fused_linear(x2, p2))
    want2 = jnp.dot(x2.astype(jnp.bfloat16), w2.astype(jnp.bfloat16),
                    preferred_element_type=jnp.float32) + b2
    assert got2.shape == (M2, N2)
    assert jnp.allclose(got2, want2, atol=2e-3, rtol=2e-3)

    print("KERNEL_OK")
</pallas_src>

<mosaic_0001>
module attributes {stable_mosaic.version = 11 : i64} {
  func.func @kernel(%arg0: i32, %arg1: i32, %arg2: i32, %arg3: memref<16x32xf32, #tpu.memory_space<vmem>>, %arg4: memref<32x128xbf16, #tpu.memory_space<vmem>>, %arg5: memref<1x128xf32, #tpu.memory_space<vmem>>, %arg6: memref<16x128xf32, #tpu.memory_space<vmem>>) attributes {dimension_semantics = [#tpu.dimension_semantics<parallel>, #tpu.dimension_semantics<parallel>, #tpu.dimension_semantics<arbitrary>], iteration_bounds = array<i64: 1, 1, 1>, scalar_prefetch = 0 : i64, scratch_operands = 0 : i64, tpu.core_type = #tpu.core_type<tc>, window_params = [{transform_indices = @transform_0, window_bounds = array<i64: 16, 32>}, {transform_indices = @transform_1, window_bounds = array<i64: 32, 128>}, {transform_indices = @transform_2, window_bounds = array<i64: 1, 128>}, {transform_indices = @transform_3, window_bounds = array<i64: 16, 128>}]} {
    %c0_i32 = arith.constant 0 : i32
    %0 = arith.cmpi eq, %arg2, %c0_i32 : i32
    %1 = arith.extui %0 : i1 to i32
    %c0_i32_0 = arith.constant 0 : i32
    %2 = arith.cmpi ne, %1, %c0_i32_0 : i32
    scf.if %2 {
      %cst_10 = arith.constant 0.000000e+00 : f32
      %13 = vector.broadcast %cst_10 : f32 to vector<16x128xf32>
      %c0_11 = arith.constant 0 : index
      %c0_12 = arith.constant 0 : index
      %14 = vector.load %arg6[%c0_11, %c0_12] : memref<16x128xf32, #tpu.memory_space<vmem>>, vector<16x128xf32>
      tpu.vector_store %arg6[%c0_11, %c0_12], %13 {strides = array<i32>} : memref<16x128xf32, #tpu.memory_space<vmem>>, vector<16x128xf32>,
    } else {
    }
    %c0 = arith.constant 0 : index
    %c0_1 = arith.constant 0 : index
    %3 = vector.load %arg6[%c0, %c0_1] : memref<16x128xf32, #tpu.memory_space<vmem>>, vector<16x128xf32>
    %c0_2 = arith.constant 0 : index
    %c0_3 = arith.constant 0 : index
    %4 = vector.load %arg3[%c0_2, %c0_3] : memref<16x32xf32, #tpu.memory_space<vmem>>, vector<16x32xf32>
    %5 = arith.truncf %4 : vector<16x32xf32> to vector<16x32xbf16>
    %c0_4 = arith.constant 0 : index
    %c0_5 = arith.constant 0 : index
    %6 = vector.load %arg4[%c0_4, %c0_5] : memref<32x128xbf16, #tpu.memory_space<vmem>>, vector<32x128xbf16>
    %cst = arith.constant dense<0.000000e+00> : vector<16x128xf32>
    %7 = tpu.matmul %5, %6, %cst {dimension_numbers = #tpu.dot_dimension_numbers<[1], [0], [0], [1], [0, 0, 1, 1], [], []>} : vector<16x32xbf16>, vector<32x128xbf16>, vector<16x128xf32> -> vector<16x128xf32>
    %8 = arith.addf %3, %7 : vector<16x128xf32>
    %c0_6 = arith.constant 0 : index
    %c0_7 = arith.constant 0 : index
    %9 = vector.load %arg6[%c0_6, %c0_7] : memref<16x128xf32, #tpu.memory_space<vmem>>, vector<16x128xf32>
    tpu.vector_store %arg6[%c0_6, %c0_7], %8 {strides = array<i32>} : memref<16x128xf32, #tpu.memory_space<vmem>>, vector<16x128xf32>,
    %c0_i32_8 = arith.constant 0 : i32
    %10 = arith.cmpi eq, %arg2, %c0_i32_8 : i32
    %11 = arith.extui %10 : i1 to i32
    %c0_i32_9 = arith.constant 0 : i32
    %12 = arith.cmpi ne, %11, %c0_i32_9 : i32
    scf.if %12 {
      %c0_10 = arith.constant 0 : index
      %c0_11 = arith.constant 0 : index
      %13 = vector.load %arg6[%c0_10, %c0_11] : memref<16x128xf32, #tpu.memory_space<vmem>>, vector<16x128xf32>
      %c0_12 = arith.constant 0 : index
      %c0_13 = arith.constant 0 : index
      %14 = vector.load %arg5[%c0_12, %c0_13] : memref<1x128xf32, #tpu.memory_space<vmem>>, vector<1x128xf32>
      %15 = vector.broadcast %14 : vector<1x128xf32> to vector<16x128xf32>
      %16 = arith.addf %13, %15 : vector<16x128xf32>
      %c0_14 = arith.constant 0 : index
      %c0_15 = arith.constant 0 : index
      %17 = vector.load %arg6[%c0_14, %c0_15] : memref<16x128xf32, #tpu.memory_space<vmem>>, vector<16x128xf32>
      tpu.vector_store %arg6[%c0_14, %c0_15], %16 {strides = array<i32>} : memref<16x128xf32, #tpu.memory_space<vmem>>, vector<16x128xf32>,
    } else {
    }
    return
  }
  func.func @transform_0(%arg0: i32, %arg1: i32, %arg2: i32) -> (i32, i32) {
    %c0_i32 = arith.constant 0 : i32
    return %arg0, %arg2 : i32, i32
  }
  func.func @transform_1(%arg0: i32, %arg1: i32, %arg2: i32) -> (i32, i32) {
    %c0_i32 = arith.constant 0 : i32
    return %arg2, %arg1 : i32, i32
  }
  func.func @transform_2(%arg0: i32, %arg1: i32, %arg2: i32) -> (i32, i32) {
    %c0_i32 = arith.constant 0 : i32
    %c0_i32_0 = arith.constant 0 : i32
    return %c0_i32, %arg1 : i32, i32
  }
  func.func @transform_3(%arg0: i32, %arg1: i32, %arg2: i32) -> (i32, i32) {
    %c0_i32 = arith.constant 0 : i32
    return %arg0, %arg1 : i32, i32
  }
}

</mosaic_0001>

<llo_original>
// kernel: tpu_custom_call.1
$region0: #{tpu_custom_call.1}
  #allocation0 [shape = 'u32[]', space=smem, size = 0x4, offset = 0x4, fixed_abs, tag = 'smem constant byte address 0x4 - core index']
  #allocation1 [shape = 'u32[144,128]{1,0:T(1,128)}', space=vmem, size = 0x12000, scoped, tag = 'internal scratch']
  %s0 = inlined_call_operand.hbm [shape: f32[16,32], index: 0, kind: input, shape index: {}]
  %s1 = inlined_call_operand.hbm [shape: bf16[32,128], index: 1, kind: input, shape index: {}]
  %s2 = inlined_call_operand.vmem [shape: f32[1,128], index: 2, kind: input, shape index: {}]
  %s3 = inlined_call_operand.hbm [shape: f32[16,128], index: 3, kind: output, shape index: {}]
  %s4 = sld [smem:[#allocation0]]
  $region38: #{tpu_custom_call.1} parent=0
    _
  %s6 = ssub.s32 1, %s4
  %s7 = scalar_select 0, %s6, %s4
  $region1: #{tpu_custom_call.1} parent=0
    #allocation2 [shape = 'u8[8192]{0}', space=vmem, size = 0x2000, scoped, tag = 'input window, operand 0, single buffered']
    #allocation3 [shape = 's32[1]{0}', space=sflag, size = 0x4, scoped, tag = 'scoped memory for tpu_custom_call.1']
    #allocation4 [shape = 's32[1]{0}', space=sflag, size = 0x4, scoped, tag = 'scoped memory for tpu_custom_call.1']
    #allocation5 [shape = 'u8[8192]{0}', space=vmem, size = 0x2000, scoped, tag = 'input window, operand 1, single buffered']
    #allocation6 [shape = 's32[1]{0}', space=sflag, size = 0x4, scoped, tag = 'scoped memory for tpu_custom_call.1']
    #allocation7 [shape = 'u8[8192]{0}', space=vmem, size = 0x2000, scoped, tag = 'output window, operand 0, single buffered']
    %8 = vsyncpa [#allocation3], 0
    %9 = vsyncpa [#allocation6], 0
    %10 = vsyncpa [#allocation4], 0
    // Predicated region
    $region2: #{tpu_custom_call.1} parent=1 // pred_check
      _
    $region3: #{tpu_custom_call.1} parent=1 // pred_check_branch
      %12 = sbr.rel (0) target = $region5
    $region4: #{tpu_custom_call.1} parent=1 // pred_region
      %s14 = ssub.s32 256, 256
      %15 = vsyncadd [#allocation3], %s14
      %s16 = sshll.u32 [#allocation2], 4
      %s17 = int_to_ptr.vmem [resolvable:$true] %s16
      %22 = dma.hbm_to_vmem [thread:$0]  %s0, 256, %s17, [#allocation3], 128, 128, 8
    $region5: #{tpu_custom_call.1} parent=1 // pred_fallthru
      _
    // Predicated region
    $region6: #{tpu_custom_call.1} parent=1 // pred_check
      _
    $region7: #{tpu_custom_call.1} parent=1 // pred_check_branch
      %24 = sbr.rel (0) target = $region9
    $region8: #{tpu_custom_call.1} parent=1 // pred_region
      %s26 = ssub.s32 256, 256
      %27 = vsyncadd [#allocation6], %s26
      %s28 = sshll.u32 [#allocation5], 4
      %s29 = int_to_ptr.vmem [resolvable:$true] %s28
      %34 = dma.hbm_to_vmem [thread:$0]  %s1, 256, %s29, [#allocation6], 64, 64, 4
    $region9: #{tpu_custom_call.1} parent=1 // pred_fallthru
      _
    // Predicated region
    $region10: #{tpu_custom_call.1} parent=1 // pred_check
      _
    $region11: #{tpu_custom_call.1} parent=1 // pred_check_branch
      %36 = sbr.rel (0) target = $region13
    $region12: #{tpu_custom_call.1} parent=1 // pred_region
      _
    $region13: #{tpu_custom_call.1} parent=1 // pred_fallthru
      _
    // Predicated region
    $region14: #{tpu_custom_call.1} parent=1 // pred_check
      _
    $region15: #{tpu_custom_call.1} parent=1 // pred_check_branch
      %38 = sbr.rel (0) target = $region17
    $region16: #{tpu_custom_call.1} parent=1 // pred_region
      %39 = dma.done [#allocation3], 256
    $region17: #{tpu_custom_call.1} parent=1 // pred_fallthru
      _
    // Predicated region
    $region18: #{tpu_custom_call.1} parent=1 // pred_check
      _
    $region19: #{tpu_custom_call.1} parent=1 // pred_check_branch
      %41 = sbr.rel (0) target = $region21
    $region20: #{tpu_custom_call.1} parent=1 // pred_region
      %42 = dma.done [#allocation6], 256
    $region21: #{tpu_custom_call.1} parent=1 // pred_fallthru
      _
    %p44 = scmp.eq.s32.totalorder 0, 0
    // Predicated region
    $region22: #{tpu_custom_call.1} parent=1 // pred_check
      %p45 = pneg %p44
    $region23: #{tpu_custom_call.1} parent=1 // pred_check_branch
      %47 = sbr.rel (%p45) target = $region25
    $region24: #{tpu_custom_call.1} parent=1 // pred_region
      %48 = vst [vmem:[#allocation7] sm:$0xff] 0.0
      %49 = vst [vmem:[#allocation7 + $0x8] sm:$0xff] 0.0
    $region25: #{tpu_custom_call.1} parent=1 // pred_fallthru
      _
    %v50 = vld [vmem:[#allocation7] sm:$0xff]
    %v51 = vld [vmem:[#allocation7 + $0x8] sm:$0xff]
    %v52 = vld [vmem:[#allocation2] sm:$0xff]
    %v53 = vld [vmem:[#allocation2 + $0x8] sm:$0xff]
    %v54 = vpack.c.bf16 %v53, %v52
    %v55 = vld [vmem:[#allocation5] sm:$0xf]
    %v56 = vld [vmem:[#allocation5 + $0x4] sm:$0xf]
    %v57 = vld [vmem:[#allocation5 + $0x8] sm:$0xf]
    %v58 = vld [vmem:[#allocation5 + $0xc] sm:$0xf]
    %v63 = vunpack.c.l.b16 %v55
    %v64 = vunpack.c.l.b16 %v56
    %v65 = vunpack.c.l.b16 %v57
    %v66 = vunpack.c.l.b16 %v58
    %v67 = vpack.c.b16 %v64, %v63
    %v68 = vpack.c.b16 %v66, %v65
    %vm71 = vcmask 261120
    %v73 = vsel %vm71, %v54, 0
    %75 = vmatprep.subr.bf16.mxu0 0
    %76 = vmatpush1.bf16.msra.mxu0 0
    %77 = vmatprep.subr.bf16.mxu0 0
    %78 = vmatpush1.bf16.msra.mxu0 0
    %79 = vmatprep.subr.bf16.mxu0 0
    %80 = vmatpush1.bf16.msra.mxu0 0
    %81 = vmatprep.subr.bf16.mxu0 0
    %82 = vmatpush1.bf16.msra.mxu0 0
    %83 = vmatprep.subr.bf16.mxu0 0
    %84 = vmatpush1.bf16.msra.mxu0 0
    %85 = vmatprep.subr.bf16.mxu0 0
    %86 = vmatpush1.bf16.msra.mxu0 0
    %87 = vmatprep.subr.bf16.mxu0 0
    %88 = vmatpush1.bf16.msra.mxu0 %v68
    %89 = vmatprep.subr.bf16.mxu0 0
    %90 = vmatpush1.bf16.msra.mxu0 %v67
    %91 = vmatprep.subr.bf16.mxu0 0
    %92 = vmatpush2.bf16.msra.mxu0 0
    %93 = vmatprep.subr.bf16.mxu0 0
    %94 = vmatpush2.bf16.msra.mxu0 0
    %95 = vmatprep.subr.bf16.mxu0 0
    %96 = vmatpush2.bf16.msra.mxu0 0
    %97 = vmatprep.subr.bf16.mxu0 0
    %98 = vmatpush2.bf16.msra.mxu0 0
    %99 = vmatprep.subr.bf16.mxu0 0
    %100 = vmatpush2.bf16.msra.mxu0 0
    %101 = vmatprep.subr.bf16.mxu0 0
    %102 = vmatpush2.bf16.msra.mxu0 0
    %103 = vmatprep.subr.bf16.mxu0 0
    %104 = vmatpush2.bf16.msra.mxu0 0
    %105 = vmatprep.subr.bf16.mxu0 0
    %106 = vmatpush2.bf16.msra.mxu0 0
    %107 = vmatprep.mubr.bf16.mxu0 0
    %108 = vmatmul.mubr.bf16.gmra.mxu0 %v73
    %v109 = vpop.f32.mrf.mxu0
    %v110 = vadd.f32 0.0, %v109
    %v111 = vpop.f32.mrf.mxu0
    %v112 = vpop.f32.mrf.mxu0
    %v113 = vadd.f32 0.0, %v112
    %v114 = vpop.f32.mrf.mxu0
    %115 = vdwg.mxu0
    %v116 = vadd.f32 %v50, %v110
    %v117 = vadd.f32 %v51, %v113
    %118 = vst [vmem:[#allocation7] sm:$0xff] %v116
    %119 = vst [vmem:[#allocation7 + $0x8] sm:$0xff] %v117
    // Predicated region
    $region26: #{tpu_custom_call.1} parent=1 // pred_check
      %p120 = pneg %p44
    $region27: #{tpu_custom_call.1} parent=1 // pred_check_branch
      %122 = sbr.rel (%p120) target = $region29
    $region28: #{tpu_custom_call.1} parent=1 // pred_region
      %v123 = vld [vmem:[#allocation7] sm:$0xff]
      %v124 = vld [vmem:[#allocation7 + $0x8] sm:$0xff]
      %v125 = vld [vmem:[%s2] sm:$0x1]
      %v127 = vlaneseq
      %v128 = vshrl.u32 %v127, 7
      %v129 = vsub.s32 0, %v128
      %v130 = vrot.slane %v125, %v129
      %v132 = vadd.f32 %v123, %v130
      %v133 = vadd.f32 %v124, %v130
      %134 = vst [vmem:[#allocation7] sm:$0xff] %v132
      %135 = vst [vmem:[#allocation7 + $0x8] sm:$0xff] %v133
    $region29: #{tpu_custom_call.1} parent=1 // pred_fallthru
      _
    // Predicated region
    $region30: #{tpu_custom_call.1} parent=1 // pred_check
      _
    $region31: #{tpu_custom_call.1} parent=1 // pred_check_branch
      %137 = sbr.rel (0) target = $region33
    $region32: #{tpu_custom_call.1} parent=1 // pred_region
      %s139 = ssub.s32 256, 256
      %140 = vsyncadd [#allocation4], %s139
      %s141 = sshll.u32 [#allocation7], 4
      %s142 = int_to_ptr.vmem [resolvable:$true] %s141
      %147 = dma.vmem_to_hbm [thread:$0]  %s142, 256, %s3, [#allocation4], 128, 128, 8
    $region33: #{tpu_custom_call.1} parent=1 // pred_fallthru
      _
    // Predicated region
    $region34: #{tpu_custom_call.1} parent=1 // pred_check
      _
    $region35: #{tpu_custom_call.1} parent=1 // pred_check_branch
      %149 = sbr.rel (0) target = $region37
    $region36: #{tpu_custom_call.1} parent=1 // pred_region
      %150 = dma.done [#allocation4], 256
    $region37: #{tpu_custom_call.1} parent=1 // pred_fallthru
      _
    %151 = vsyncpa [#allocation3], 1
    %152 = vsyncpa [#allocation6], 1
    %153 = vsyncpa [#allocation4], 1

</llo_original>
